<compile_context>
chip_gen: v7x
topology: tpu7x:2x2x1
jax: 0.10.0
libtpu: 0.0.40
codegen_flags: <defaults>
</compile_context>

<pallas_src>
import functools
import math

import jax
import jax.numpy as jnp
import numpy as np
from jax.experimental import pallas as pl
from jax.experimental.pallas import tpu as pltpu


# ----------------------------- host-side tap tables --------------------------------------------
def _gaussian_1d(kernel_size: int, sigma: float) -> np.ndarray:
    """Normalized 1-D gaussian; outer(g, g) equals the module's normalized 2-D kernel."""
    coords = np.arange(kernel_size, dtype=np.float64)
    mean = (kernel_size - 1) / 2.0
    g = np.exp(-((coords - mean) ** 2) / (2.0 * sigma ** 2))
    return g / g.sum()


def _reflect_fold_taps(size: int, k1: np.ndarray) -> np.ndarray:
    """Fold reflection padding into per-position circular tap weights.

    Returns coef of shape (k, size) such that
        out[i] = sum_{o=-pad..pad} coef[o+pad, i] * x[(i+o) % size]
    equals the reflection-padded 'valid' 1-D convolution with taps k1.  Wherever i+o would fall
    outside [0, size), coef is exactly zero, so the circular wrap of a roll is harmless.
    """
    k = len(k1)
    pad = (k - 1) // 2
    coef = np.zeros((k, size), dtype=np.float64)
    for i in range(size):
        for d in range(k):
            j = i + d - pad
            if j < 0:
                j = -j
            elif j >= size:
                j = 2 * (size - 1) - j
            o = j - i
            assert -pad <= o <= pad
            coef[o + pad, i] += k1[d]
    return coef


# ----------------------------- Pallas kernel ----------------------------------------------------
def _gauss_kernel(cw_ref, ch_ref, x_ref, o_ref, *, pad):
    _, H, W = x_ref.shape
    xf = x_ref[...].astype(jnp.float32)                    # (cblk, H, W): cast hoisted out of taps

    # --- row pass along W (lane axis): XLU rolls + folded-reflection column weights ---
    tmp = cw_ref[pad][None] * xf                           # o = 0 tap; cw row -> (1, 1, W)
    for o in range(1, pad + 1):
        tmp = tmp + cw_ref[pad + o][None] * pltpu.roll(xf, shift=W - o, axis=2)   # x[i+o]
        tmp = tmp + cw_ref[pad - o][None] * pltpu.roll(xf, shift=o, axis=2)       # x[i-o]

    # --- column pass along H (sublane axis) ---
    acc = ch_ref[pad][None] * tmp                          # ch row -> (1, H, 1)
    for o in range(1, pad + 1):
        acc = acc + ch_ref[pad + o][None] * pltpu.roll(tmp, shift=H - o, axis=1)
        acc = acc + ch_ref[pad - o][None] * pltpu.roll(tmp, shift=o, axis=1)

    o_ref[...] = acc.astype(o_ref.dtype)                   # single full-tile store


def spatial_gaussian_kernel(x: jax.Array, kernel_size: int, sigma: float) -> jax.Array:
    """x: (N, C, H, W) -> (N, C, H, W). Same forward semantics as SpatialGaussianKernel."""
    assert kernel_size % 2 == 1, "kernel_size must be odd"
    N, C, H, W = x.shape
    pad = (kernel_size - 1) // 2
    assert pad <= min(H, W) - 1, "reflection pad requires (kernel_size-1)//2 <= min(H,W)-1"

    k1 = _gaussian_1d(kernel_size, sigma)
    cw = jnp.asarray(_reflect_fold_taps(W, k1).reshape(kernel_size, 1, W), dtype=jnp.float32)
    ch = jnp.asarray(_reflect_fold_taps(H, k1).reshape(kernel_size, H, 1), dtype=jnp.float32)

    itemsize = jnp.dtype(x.dtype).itemsize

    # Per-generation VMEM limit (v7x has 64 MiB, v5e/v6e have 128 MiB).
    try:
        vmem_cap = int(pltpu.get_tpu_info().vmem_capacity_bytes)
    except Exception:
        vmem_cap = 64 * 1024 * 1024
    vmem_limit = min(max(32 * 1024 * 1024, (3 * vmem_cap) // 4), 100 * 1024 * 1024)

    # Channel-block sizing: count double-buffered in + out blocks (storage dtype) plus ~5 live
    # f32 temporaries (xf, tmp, acc, rolled slice, product) against a quarter of the limit.
    budget = vmem_limit // 4
    per_chan = H * W * (4 * itemsize + 5 * 4)
    max_c = max(1, budget // per_chan)
    cblk = 1
    for cand in range(min(C, max_c), 0, -1):
        if C % cand == 0:
            cblk = cand
            break
    # TODO(synk): tile H with a `pad`-row halo (pl.Element offsets) when even a single channel
    # plane (H*W) exceeds the VMEM budget; not needed for typical feature-map sizes.

    flops = 4 * kernel_size * N * C * H * W
    bytes_accessed = 2 * N * C * H * W * itemsize

    return pl.pallas_call(
        functools.partial(_gauss_kernel, pad=pad),
        out_shape=jax.ShapeDtypeStruct((N, C, H, W), x.dtype),
        grid_spec=pltpu.PrefetchScalarGridSpec(
            num_scalar_prefetch=0,
            grid=(N, C // cblk),
            in_specs=[
                pl.BlockSpec((kernel_size, 1, W), lambda n, c: (0, 0, 0)),   # W tap table
                pl.BlockSpec((kernel_size, H, 1), lambda n, c: (0, 0, 0)),   # H tap table
                pl.BlockSpec((None, cblk, H, W), lambda n, c: (n, c, 0, 0)), # input block (batch squeezed)
            ],
            out_specs=pl.BlockSpec((None, cblk, H, W), lambda n, c: (n, c, 0, 0)),
        ),
        compiler_params=pltpu.CompilerParams(
            dimension_semantics=("parallel", "parallel"),
            vmem_limit_bytes=vmem_limit,
        ),
        cost_estimate=pl.CostEstimate(
            flops=flops, transcendentals=0, bytes_accessed=bytes_accessed),
    )(cw, ch, x)


# ----------------------------- pure-JAX reference ----------------------------------------------
def _gaussian_kernel_2d(kernel_size: int, sigma: float) -> np.ndarray:
    """Identical math to the PyTorch __init__ (2-D kernel)."""
    variance = sigma ** 2.0
    coords = np.arange(kernel_size, dtype=np.float32)
    x_grid = np.tile(coords, kernel_size).reshape(kernel_size, kernel_size)
    y_grid = x_grid.T
    mean_xy = (kernel_size - 1) / 2.0
    dist2 = (x_grid - mean_xy) ** 2.0 + (y_grid - mean_xy) ** 2.0
    k2d = (1.0 / (2.0 * math.pi * variance)) * np.exp(-dist2 / (2.0 * variance))
    return (k2d / k2d.sum()).astype(np.float32)


def _reference(x: jax.Array, kernel_size: int, sigma: float) -> jax.Array:
    N, C, H, W = x.shape
    pad = (kernel_size - 1) // 2
    k2d = jnp.asarray(_gaussian_kernel_2d(kernel_size, sigma))
    xpad = jnp.pad(x, ((0, 0), (0, 0), (pad, pad), (pad, pad)), mode="reflect")
    w = jnp.broadcast_to(k2d, (C, 1, kernel_size, kernel_size))
    return jax.lax.conv_general_dilated(
        xpad, w, window_strides=(1, 1), padding="VALID",
        dimension_numbers=("NCHW", "OIHW", "NCHW"), feature_group_count=C,
        precision=jax.lax.Precision.HIGHEST,
    )


if __name__ == "__main__":
    kernel_size = 5
    sigma = 1.0
    N, C, H, W = 2, 4, 16, 16

    key = jax.random.PRNGKey(0)
    x = jax.random.normal(key, (N, C, H, W), dtype=jnp.float32)

    out = spatial_gaussian_kernel(x, kernel_size, sigma)
    out = jax.block_until_ready(out)

    ref = jax.block_until_ready(_reference(x, kernel_size, sigma))
    assert out.shape == (N, C, H, W)
    assert jnp.allclose(out, ref, atol=1e-5, rtol=1e-5), "mismatch vs reference"

    print("KERNEL_OK")
</pallas_src>

<mosaic_0001>
module attributes {stable_mosaic.version = 11 : i64} {
  func.func @_gauss_kernel(%arg0: i32, %arg1: i32, %arg2: memref<5x1x16xf32, #tpu.memory_space<vmem>>, %arg3: memref<5x16x1xf32, #tpu.memory_space<vmem>>, %arg4: memref<1x4x16x16xf32, #tpu.memory_space<vmem>>, %arg5: memref<1x4x16x16xf32, #tpu.memory_space<vmem>>) attributes {dimension_semantics = [#tpu.dimension_semantics<parallel>, #tpu.dimension_semantics<parallel>], iteration_bounds = array<i64: 2, 1>, scalar_prefetch = 0 : i64, scratch_operands = 0 : i64, tpu.core_type = #tpu.core_type<tc>, window_params = [{pipeline_mode = #tpu.pipeline_mode<synchronous>, transform_indices = @transform_0, window_bounds = array<i64: 5, 1, 16>}, {pipeline_mode = #tpu.pipeline_mode<synchronous>, transform_indices = @transform_1, window_bounds = array<i64: 5, 16, 1>}, {transform_indices = @transform_2, window_bounds = array<i64: 1, 4, 16, 16>}, {transform_indices = @transform_3, window_bounds = array<i64: 1, 4, 16, 16>}]} {
    %c0 = arith.constant 0 : index
    %c0_0 = arith.constant 0 : index
    %c0_1 = arith.constant 0 : index
    %c0_2 = arith.constant 0 : index
    %0 = vector.load %arg4[%c0, %c0_0, %c0_1, %c0_2] : memref<1x4x16x16xf32, #tpu.memory_space<vmem>>, vector<1x4x16x16xf32>
    %1 = vector.shape_cast %0 : vector<1x4x16x16xf32> to vector<4x16x16xf32>
    %c2 = arith.constant 2 : index
    %c0_3 = arith.constant 0 : index
    %c0_4 = arith.constant 0 : index
    %2 = vector.load %arg2[%c2, %c0_3, %c0_4] : memref<5x1x16xf32, #tpu.memory_space<vmem>>, vector<1x1x16xf32>
    %3 = vector.shape_cast %2 : vector<1x1x16xf32> to vector<1x16xf32>
    %4 = vector.shape_cast %3 : vector<1x16xf32> to vector<1x1x16xf32>
    %5 = vector.broadcast %4 : vector<1x1x16xf32> to vector<4x16x16xf32>
    %6 = arith.mulf %5, %1 : vector<4x16x16xf32>
    %c3 = arith.constant 3 : index
    %c0_5 = arith.constant 0 : index
    %c0_6 = arith.constant 0 : index
    %7 = vector.load %arg2[%c3, %c0_5, %c0_6] : memref<5x1x16xf32, #tpu.memory_space<vmem>>, vector<1x1x16xf32>
    %8 = vector.shape_cast %7 : vector<1x1x16xf32> to vector<1x16xf32>
    %9 = vector.shape_cast %8 : vector<1x16xf32> to vector<1x1x16xf32>
    %c15_i32 = arith.constant 15 : i32
    %10 = tpu.dynamic_rotate %1 by %c15_i32 dim 2 : vector<4x16x16xf32>, i32 -> vector<4x16x16xf32>
    %11 = vector.broadcast %9 : vector<1x1x16xf32> to vector<4x16x16xf32>
    %12 = arith.mulf %11, %10 : vector<4x16x16xf32>
    %13 = arith.addf %6, %12 : vector<4x16x16xf32>
    %c1 = arith.constant 1 : index
    %c0_7 = arith.constant 0 : index
    %c0_8 = arith.constant 0 : index
    %14 = vector.load %arg2[%c1, %c0_7, %c0_8] : memref<5x1x16xf32, #tpu.memory_space<vmem>>, vector<1x1x16xf32>
    %15 = vector.shape_cast %14 : vector<1x1x16xf32> to vector<1x16xf32>
    %16 = vector.shape_cast %15 : vector<1x16xf32> to vector<1x1x16xf32>
    %c1_i32 = arith.constant 1 : i32
    %17 = tpu.dynamic_rotate %1 by %c1_i32 dim 2 : vector<4x16x16xf32>, i32 -> vector<4x16x16xf32>
    %18 = vector.broadcast %16 : vector<1x1x16xf32> to vector<4x16x16xf32>
    %19 = arith.mulf %18, %17 : vector<4x16x16xf32>
    %20 = arith.addf %13, %19 : vector<4x16x16xf32>
    %c4 = arith.constant 4 : index
    %c0_9 = arith.constant 0 : index
    %c0_10 = arith.constant 0 : index
    %21 = vector.load %arg2[%c4, %c0_9, %c0_10] : memref<5x1x16xf32, #tpu.memory_space<vmem>>, vector<1x1x16xf32>
    %22 = vector.shape_cast %21 : vector<1x1x16xf32> to vector<1x16xf32>
    %23 = vector.shape_cast %22 : vector<1x16xf32> to vector<1x1x16xf32>
    %c14_i32 = arith.constant 14 : i32
    %24 = tpu.dynamic_rotate %1 by %c14_i32 dim 2 : vector<4x16x16xf32>, i32 -> vector<4x16x16xf32>
    %25 = vector.broadcast %23 : vector<1x1x16xf32> to vector<4x16x16xf32>
    %26 = arith.mulf %25, %24 : vector<4x16x16xf32>
    %27 = arith.addf %20, %26 : vector<4x16x16xf32>
    %c0_11 = arith.constant 0 : index
    %c0_12 = arith.constant 0 : index
    %c0_13 = arith.constant 0 : index
    %28 = vector.load %arg2[%c0_11, %c0_12, %c0_13] : memref<5x1x16xf32, #tpu.memory_space<vmem>>, vector<1x1x16xf32>
    %29 = vector.shape_cast %28 : vector<1x1x16xf32> to vector<1x16xf32>
    %30 = vector.shape_cast %29 : vector<1x16xf32> to vector<1x1x16xf32>
    %c2_i32 = arith.constant 2 : i32
    %31 = tpu.dynamic_rotate %1 by %c2_i32 dim 2 : vector<4x16x16xf32>, i32 -> vector<4x16x16xf32>
    %32 = vector.broadcast %30 : vector<1x1x16xf32> to vector<4x16x16xf32>
    %33 = arith.mulf %32, %31 : vector<4x16x16xf32>
    %34 = arith.addf %27, %33 : vector<4x16x16xf32>
    %c2_14 = arith.constant 2 : index
    %c0_15 = arith.constant 0 : index
    %c0_16 = arith.constant 0 : index
    %35 = vector.load %arg3[%c2_14, %c0_15, %c0_16] : memref<5x16x1xf32, #tpu.memory_space<vmem>>, vector<1x16x1xf32>
    %36 = vector.shape_cast %35 : vector<1x16x1xf32> to vector<16x1xf32>
    %37 = vector.shape_cast %36 : vector<16x1xf32> to vector<1x16x1xf32>
    %38 = vector.broadcast %37 : vector<1x16x1xf32> to vector<4x16x16xf32>
    %39 = arith.mulf %38, %34 : vector<4x16x16xf32>
    %c3_17 = arith.constant 3 : index
    %c0_18 = arith.constant 0 : index
    %c0_19 = arith.constant 0 : index
    %40 = vector.load %arg3[%c3_17, %c0_18, %c0_19] : memref<5x16x1xf32, #tpu.memory_space<vmem>>, vector<1x16x1xf32>
    %41 = vector.shape_cast %40 : vector<1x16x1xf32> to vector<16x1xf32>
    %42 = vector.shape_cast %41 : vector<16x1xf32> to vector<1x16x1xf32>
    %c15_i32_20 = arith.constant 15 : i32
    %43 = tpu.dynamic_rotate %34 by %c15_i32_20 dim 1 : vector<4x16x16xf32>, i32 -> vector<4x16x16xf32>
    %44 = vector.broadcast %42 : vector<1x16x1xf32> to vector<4x16x16xf32>
    %45 = arith.mulf %44, %43 : vector<4x16x16xf32>
    %46 = arith.addf %39, %45 : vector<4x16x16xf32>
    %c1_21 = arith.constant 1 : index
    %c0_22 = arith.constant 0 : index
    %c0_23 = arith.constant 0 : index
    %47 = vector.load %arg3[%c1_21, %c0_22, %c0_23] : memref<5x16x1xf32, #tpu.memory_space<vmem>>, vector<1x16x1xf32>
    %48 = vector.shape_cast %47 : vector<1x16x1xf32> to vector<16x1xf32>
    %49 = vector.shape_cast %48 : vector<16x1xf32> to vector<1x16x1xf32>
    %c1_i32_24 = arith.constant 1 : i32
    %50 = tpu.dynamic_rotate %34 by %c1_i32_24 dim 1 : vector<4x16x16xf32>, i32 -> vector<4x16x16xf32>
    %51 = vector.broadcast %49 : vector<1x16x1xf32> to vector<4x16x16xf32>
    %52 = arith.mulf %51, %50 : vector<4x16x16xf32>
    %53 = arith.addf %46, %52 : vector<4x16x16xf32>
    %c4_25 = arith.constant 4 : index
    %c0_26 = arith.constant 0 : index
    %c0_27 = arith.constant 0 : index
    %54 = vector.load %arg3[%c4_25, %c0_26, %c0_27] : memref<5x16x1xf32, #tpu.memory_space<vmem>>, vector<1x16x1xf32>
    %55 = vector.shape_cast %54 : vector<1x16x1xf32> to vector<16x1xf32>
    %56 = vector.shape_cast %55 : vector<16x1xf32> to vector<1x16x1xf32>
    %c14_i32_28 = arith.constant 14 : i32
    %57 = tpu.dynamic_rotate %34 by %c14_i32_28 dim 1 : vector<4x16x16xf32>, i32 -> vector<4x16x16xf32>
    %58 = vector.broadcast %56 : vector<1x16x1xf32> to vector<4x16x16xf32>
    %59 = arith.mulf %58, %57 : vector<4x16x16xf32>
    %60 = arith.addf %53, %59 : vector<4x16x16xf32>
    %c0_29 = arith.constant 0 : index
    %c0_30 = arith.constant 0 : index
    %c0_31 = arith.constant 0 : index
    %61 = vector.load %arg3[%c0_29, %c0_30, %c0_31] : memref<5x16x1xf32, #tpu.memory_space<vmem>>, vector<1x16x1xf32>
    %62 = vector.shape_cast %61 : vector<1x16x1xf32> to vector<16x1xf32>
    %63 = vector.shape_cast %62 : vector<16x1xf32> to vector<1x16x1xf32>
    %c2_i32_32 = arith.constant 2 : i32
    %64 = tpu.dynamic_rotate %34 by %c2_i32_32 dim 1 : vector<4x16x16xf32>, i32 -> vector<4x16x16xf32>
    %65 = vector.broadcast %63 : vector<1x16x1xf32> to vector<4x16x16xf32>
    %66 = arith.mulf %65, %64 : vector<4x16x16xf32>
    %67 = arith.addf %60, %66 : vector<4x16x16xf32>
    %c0_33 = arith.constant 0 : index
    %c0_34 = arith.constant 0 : index
    %c0_35 = arith.constant 0 : index
    %c0_36 = arith.constant 0 : index
    %68 = vector.load %arg5[%c0_33, %c0_34, %c0_35, %c0_36] : memref<1x4x16x16xf32, #tpu.memory_space<vmem>>, vector<1x4x16x16xf32>
    %69 = vector.shape_cast %68 : vector<1x4x16x16xf32> to vector<4x16x16xf32>
    %70 = vector.shape_cast %67 : vector<4x16x16xf32> to vector<1x4x16x16xf32>
    tpu.vector_store %arg5[%c0_33, %c0_34, %c0_35, %c0_36], %70 {strides = array<i32>} : memref<1x4x16x16xf32, #tpu.memory_space<vmem>>, vector<1x4x16x16xf32>,
    return
  }
  func.func @transform_0(%arg0: i32, %arg1: i32) -> (i32, i32, i32) {
    %c0_i32 = arith.constant 0 : i32
    %c0_i32_0 = arith.constant 0 : i32
    %c0_i32_1 = arith.constant 0 : i32
    %c0_i32_2 = arith.constant 0 : i32
    return %c0_i32, %c0_i32_0, %c0_i32_1 : i32, i32, i32
  }
  func.func @transform_1(%arg0: i32, %arg1: i32) -> (i32, i32, i32) {
    %c0_i32 = arith.constant 0 : i32
    %c0_i32_0 = arith.constant 0 : i32
    %c0_i32_1 = arith.constant 0 : i32
    %c0_i32_2 = arith.constant 0 : i32
    return %c0_i32, %c0_i32_0, %c0_i32_1 : i32, i32, i32
  }
  func.func @transform_2(%arg0: i32, %arg1: i32) -> (i32, i32, i32, i32) {
    %c0_i32 = arith.constant 0 : i32
    %c0_i32_0 = arith.constant 0 : i32
    %c0_i32_1 = arith.constant 0 : i32
    return %arg0, %arg1, %c0_i32, %c0_i32_0 : i32, i32, i32, i32
  }
  func.func @transform_3(%arg0: i32, %arg1: i32) -> (i32, i32, i32, i32) {
    %c0_i32 = arith.constant 0 : i32
    %c0_i32_0 = arith.constant 0 : i32
    %c0_i32_1 = arith.constant 0 : i32
    return %arg0, %arg1, %c0_i32, %c0_i32_0 : i32, i32, i32, i32
  }
}

</mosaic_0001>

<llo_original>
// kernel: tpu_custom_call.1
$region0: #{tpu_custom_call.1}
  #allocation0 [shape = 'u32[]', space=smem, size = 0x4, offset = 0x4, fixed_abs, tag = 'smem constant byte address 0x4 - core index']
  #allocation1 [shape = 'u32[144,128]{1,0:T(1,128)}', space=vmem, size = 0x12000, scoped, tag = 'internal scratch']
  %s0 = inlined_call_operand.vmem [shape: f32[5,1,16], index: 0, kind: input, shape index: {}]
  %s1 = inlined_call_operand.vmem [shape: f32[5,16,1], index: 1, kind: input, shape index: {}]
  %s2 = inlined_call_operand.hbm [shape: f32[2,4,16,16], index: 2, kind: input, shape index: {}]
  %s3 = inlined_call_operand.hbm [shape: f32[2,4,16,16], index: 3, kind: output, shape index: {}]
  %s4 = sld [smem:[#allocation0]]
  $region49: #{tpu_custom_call.1} parent=0
    _
  %s6 = ssub.s32 1, %s4
  %s7 = scalar_select 0, %s6, %s4
  $region1: #{tpu_custom_call.1} parent=0
    #allocation2 [shape = 'u8[65536]{0}', space=vmem, size = 0x10000, scoped, tag = 'input window, operand 2']
    #allocation3 [shape = 's32[2]{0}', space=sflag, size = 0x8, scoped, tag = 'scoped memory for tpu_custom_call.1']
    #allocation4 [shape = 's32[2]{0}', space=sflag, size = 0x8, scoped, tag = 'scoped memory for tpu_custom_call.1']
    #allocation5 [shape = 'u8[65536]{0}', space=vmem, size = 0x10000, scoped, tag = 'output window, operand 0']
    %8 = vsyncpa [#allocation3], 0
    %s9 = scalar_lea.sflag [#allocation3], 1
    %10 = vsyncpa %s9, 0
    %11 = vsyncpa [#allocation4], 0
    %s12 = scalar_lea.sflag [#allocation4], 1
    %13 = vsyncpa %s12, 0
    loop: start=0, step=1, limit=4
    $region2: #{tpu_custom_call.1} parent=1 // loop_pre_header
      _
    $region3: #{tpu_custom_call.1} parent=1 // loop_header
      %s15 = sphi 0, %s19
      %p16 = scmp.ge.s32.totalorder %s15, 4
      %s22 = sphi 0, %s34
      %s23 = sphi 0, %s30
      %s24 = sphi 0, %s22
      %s25 = sphi 0, %s23
      %s26 = sphi 0, %s24
      %s27 = sphi 0, %s25
      %s35 = sphi 0, %s35
      %s37 = sphi 0, %s35
      %s38 = sphi 0, %s37
      %s52 = sphi 0, %s38
      %s56 = sphi 0, %s56
      %s58 = sphi 0, %s56
      %s59 = sphi 0, %s58
      %s73 = sphi 0, %s59
      %s81 = sphi 0, %s83
      %s84 = sphi 0, %s81
      %s85 = sphi 0, %s84
      %s101 = sphi 0, %s85
      %s109 = sphi 0, %s111
      %s112 = sphi 0, %s109
      %s113 = sphi 0, %s112
      %s129 = sphi 0, %s113
    $region4: #{tpu_custom_call.1} parent=1 // loop_header_branch
      %18 = sbr.rel (%p16) target = $region8
    $region5: #{tpu_custom_call.1} parent=1 // loop_body
      %s20 = ssub.s32 %s15, 1
      %s21 = ssub.s32 %s15, 2
      %s28 = sadd.s32 1, %s23
      %p29 = scmp.ge.s32.totalorder %s28, 1
      %s30 = scalar_select %p29, 0, %s28
      %s31 = sadd.s32 1, %s22
      %s32 = scalar_select %p29, %s31, %s22
      %p33 = scmp.ge.s32.totalorder %s32, 2
      %s34 = scalar_select %p33, 0, %s32
      %s36 = sadd.s32 %s35, 1
      %p39 = scmp.eq.s32.totalorder %s15, 1
      %p40 = scmp.ne.s32.totalorder %s35, %s37
      %p41 = scmp.eq.s32.totalorder %s15, 0
      %p42 = por %p40, %p41
      %p43 = scmp.ne.s32.totalorder %s35, %s37
      %p44 = scmp.eq.s32.totalorder %s20, 1
      %p45 = por %p43, %p44
      %p46 = scmp.ne.s32.totalorder %s37, %s38
      %p47 = scmp.eq.s32.totalorder %s20, 0
      %p48 = por %p46, %p47
      %p49 = scmp.ne.s32.totalorder %s37, %s38
      %p50 = scmp.eq.s32.totalorder %s21, 1
      %p51 = por %p49, %p50
      %p53 = scmp.ne.s32.totalorder %s38, %s52
      %p54 = scmp.eq.s32.totalorder %s21, 0
      %p55 = por %p53, %p54
      %s57 = sadd.s32 %s56, 1
      %p60 = scmp.eq.s32.totalorder %s15, 1
      %p61 = scmp.ne.s32.totalorder %s56, %s58
      %p62 = scmp.eq.s32.totalorder %s15, 0
      %p63 = por %p61, %p62
      %p64 = scmp.ne.s32.totalorder %s56, %s58
      %p65 = scmp.eq.s32.totalorder %s20, 1
      %p66 = por %p64, %p65
      %p67 = scmp.ne.s32.totalorder %s58, %s59
      %p68 = scmp.eq.s32.totalorder %s20, 0
      %p69 = por %p67, %p68
      %p70 = scmp.ne.s32.totalorder %s58, %s59
      %p71 = scmp.eq.s32.totalorder %s21, 1
      %p72 = por %p70, %p71
      %p74 = scmp.ne.s32.totalorder %s59, %s73
      %p75 = scmp.eq.s32.totalorder %s21, 0
      %p76 = por %p74, %p75
      %s77 = ssub.s32 %s22, %s34
      %s78 = ssub.s32 %s23, %s30
      %s79 = sor.u32 %s77, %s78
      %p80 = scmp.eq.s32.totalorder %s79, 0
      %s82 = sadd.s32 %s81, 1
      %s83 = scalar_select %p80, %s81, %s82
      %p86 = pneg %p80
      %p87 = scmp.eq.s32.totalorder %s15, 1
      %p88 = por %p86, %p87
      %p89 = scmp.ne.s32.totalorder %s81, %s84
      %p90 = scmp.eq.s32.totalorder %s15, 0
      %p91 = por %p89, %p90
      %p92 = scmp.ne.s32.totalorder %s81, %s84
      %p93 = scmp.eq.s32.totalorder %s20, 1
      %p94 = por %p92, %p93
      %p95 = scmp.ne.s32.totalorder %s84, %s85
      %p96 = scmp.eq.s32.totalorder %s20, 0
      %p97 = por %p95, %p96
      %p98 = scmp.ne.s32.totalorder %s84, %s85
      %p99 = scmp.eq.s32.totalorder %s21, 1
      %p100 = por %p98, %p99
      %p102 = scmp.ne.s32.totalorder %s85, %s101
      %p103 = scmp.eq.s32.totalorder %s21, 0
      %p104 = por %p102, %p103
      %s105 = ssub.s32 %s22, %s34
      %s106 = ssub.s32 %s23, %s30
      %s107 = sor.u32 %s105, %s106
      %p108 = scmp.eq.s32.totalorder %s107, 0
      %s110 = sadd.s32 %s109, 1
      %s111 = scalar_select %p108, %s109, %s110
      %p114 = pneg %p108
      %p115 = scmp.eq.s32.totalorder %s15, 1
      %p116 = por %p114, %p115
      %p117 = scmp.ne.s32.totalorder %s109, %s112
      %p118 = scmp.eq.s32.totalorder %s15, 0
      %p119 = por %p117, %p118
      %p120 = scmp.ne.s32.totalorder %s109, %s112
      %p121 = scmp.eq.s32.totalorder %s20, 1
      %p122 = por %p120, %p121
      %p123 = scmp.ne.s32.totalorder %s112, %s113
      %p124 = scmp.eq.s32.totalorder %s20, 0
      %p125 = por %p123, %p124
      %p126 = scmp.ne.s32.totalorder %s112, %s113
      %p127 = scmp.eq.s32.totalorder %s21, 1
      %p128 = por %p126, %p127
      %p130 = scmp.ne.s32.totalorder %s113, %s129
      %p131 = scmp.eq.s32.totalorder %s21, 0
      %p132 = por %p130, %p131
      %p133 = scmp.le.s32.totalorder 1, %s15
      %p134 = scmp.lt.s32.totalorder %s15, 3
      %p135 = pnand %p133, %p134
      %p136 = pneg %p135
      // Predicated region
      $region9: #{tpu_custom_call.1} parent=5 // pred_check
        _
      $region10: #{tpu_custom_call.1} parent=5 // pred_check_branch
        %138 = sbr.rel (%p135) target = $region12
      $region11: #{tpu_custom_call.1} parent=5 // pred_region
        %s139 = ssub.s32 %s15, 1
        // Predicated region
        $region13: #{tpu_custom_call.1} parent=11 // pred_check
          %p140 = pneg %p48
        $region14: #{tpu_custom_call.1} parent=11 // pred_check_branch
          %142 = sbr.rel (%p140) target = $region16
        $region15: #{tpu_custom_call.1} parent=11 // pred_region
          _
        $region16: #{tpu_custom_call.1} parent=11 // pred_fallthru
          _
        // Predicated region
        $region17: #{tpu_custom_call.1} parent=11 // pred_check
          %p143 = pneg %p69
        $region18: #{tpu_custom_call.1} parent=11 // pred_check_branch
          %145 = sbr.rel (%p143) target = $region20
        $region19: #{tpu_custom_call.1} parent=11 // pred_region
          _
        $region20: #{tpu_custom_call.1} parent=11 // pred_fallthru
          _
      $region12: #{tpu_custom_call.1} parent=5 // pred_fallthru
        _
      %p146 = scmp.lt.s32.totalorder %s15, 2
      // Predicated region
      $region21: #{tpu_custom_call.1} parent=5 // pred_check
        %p147 = pneg %p146
      $region22: #{tpu_custom_call.1} parent=5 // pred_check_branch
        %149 = sbr.rel (%p147) target = $region24
      $region23: #{tpu_custom_call.1} parent=5 // pred_region
        // Predicated region
        $region25: #{tpu_custom_call.1} parent=23 // pred_check
          %p150 = pneg %p91
        $region26: #{tpu_custom_call.1} parent=23 // pred_check_branch
          %152 = sbr.rel (%p150) target = $region28
        $region27: #{tpu_custom_call.1} parent=23 // pred_region
          %s153 = sand.u32 %s81, 1
          %s154 = scalar_lea.sflag [#allocation3], %s153
          %s155 = sand.u32 %s81, 1
          %s156 = smul.addr %s155, 64
          %s157 = scalar_lea.vmem [#allocation2], %s156
          %s158 = smul.u32 4, %s23
          %s160 = ssub.s32 1024, 1024
          %161 = vsyncadd %s154, %s160
          %s162 = smul.addr %s158, 2
          %s163 = smul.addr %s22, 8
          %s164 = sadd.s32 %s162, %s163
          %s165 = smul.addr %s164, 128
          %s166 = scalar_lea.hbm %s2, %s165
          %s167 = sshll.u32 %s157, 4
          %s168 = int_to_ptr.vmem [resolvable:$true] %s167
          %173 = dma.hbm_to_vmem [thread:$0]  %s166, 1024, %s168, %s154, 128, 128, 8
        $region28: #{tpu_custom_call.1} parent=23 // pred_fallthru
          _
      $region24: #{tpu_custom_call.1} parent=5 // pred_fallthru
        _
      %p174 = scmp.le.s32.totalorder 1, %s15
      %p175 = scmp.lt.s32.totalorder %s15, 3
      %p176 = pnand %p174, %p175
      %p177 = pneg %p176
      // Predicated region
      $region29: #{tpu_custom_call.1} parent=5 // pred_check
        _
      $region30: #{tpu_custom_call.1} parent=5 // pred_check_branch
        %179 = sbr.rel (%p176) target = $region32
      $region31: #{tpu_custom_call.1} parent=5 // pred_region
        %s180 = ssub.s32 %s15, 1
        %s181 = sand.u32 %s84, 1
        %s182 = scalar_lea.sflag [#allocation3], %s181
        %s183 = sand.u32 %s84, 1
        %s184 = smul.addr %s183, 64
        %s185 = scalar_lea.vmem [#allocation2], %s184
        // Predicated region
        $region33: #{tpu_custom_call.1} parent=31 // pred_check
          %p186 = pneg %p97
        $region34: #{tpu_custom_call.1} parent=31 // pred_check_branch
          %188 = sbr.rel (%p186) target = $region36
        $region35: #{tpu_custom_call.1} parent=31 // pred_region
          %189 = dma.done %s182, 1024
        $region36: #{tpu_custom_call.1} parent=31 // pred_fallthru
          _
        %p190 = pneg %p48
        %p191 = pneg %p45
        %p192 = pneg %p69
        %p193 = pneg %p66
        %s194 = sand.u32 %s84, 1
        %s195 = scalar_lea.sflag [#allocation3], %s194
        %s196 = sand.u32 %s84, 1
        %s197 = smul.addr %s196, 64
        %s198 = scalar_lea.vmem [#allocation2], %s197
        %p199 = pneg %p97
        %p200 = pneg %p94
        %p201 = pneg %p125
        %p202 = pneg %p122
        %s203 = sand.u32 %s112, 1
        %s204 = scalar_lea.sflag [#allocation4], %s203
        %s205 = sand.u32 %s112, 1
        %s206 = smul.addr %s205, 64
        %s207 = scalar_lea.vmem [#allocation5], %s206
        %s208 = smul.u32 4, %s25
        %s209 = smul.u32 4, %s25
        %v210 = vld [vmem:[%s185] sm:$0xff]
        %v211 = vld [vmem:[%s185 + $0x8] sm:$0xff]
        %v212 = vld [vmem:[%s185 + $0x10] sm:$0xff]
        %v213 = vld [vmem:[%s185 + $0x18] sm:$0xff]
        %v214 = vld [vmem:[%s185 + $0x20] sm:$0xff]
        %v215 = vld [vmem:[%s185 + $0x28] sm:$0xff]
        %v216 = vld [vmem:[%s185 + $0x30] sm:$0xff]
        %v217 = vld [vmem:[%s185 + $0x38] sm:$0xff]
        %s218 = scalar_lea.vmem %s0, 2
        %v219 = vld [vmem:[%s218] sm:$0x1]
        %v221 = vlaneseq
        %v222 = vshrl.u32 %v221, 7
        %v223 = vsub.s32 0, %v222
        %v224 = vrot.slane %v219, %v223
        %v226 = vmul.f32 %v224, %v210
        %v227 = vmul.f32 %v224, %v211
        %v228 = vmul.f32 %v224, %v212
        %v229 = vmul.f32 %v224, %v213
        %v230 = vmul.f32 %v224, %v214
        %v231 = vmul.f32 %v224, %v215
        %v232 = vmul.f32 %v224, %v216
        %v233 = vmul.f32 %v224, %v217
        %s234 = scalar_lea.vmem %s0, 3
        %v235 = vld [vmem:[%s234] sm:$0x1]
        %vm236 = vcmask 1047680
        %237 = vrot.lane.b32.xlu0 %v210, 16
        %v238 = vpop.permute.xlu0 %237
        %v239 = vsel %vm236, %v238, %v210
        %240 = vrot.lane.b32.xlu0 %v211, 16
        %v241 = vpop.permute.xlu0 %240
        %v242 = vsel %vm236, %v241, %v211
        %243 = vrot.lane.b32.xlu0 %v212, 16
        %v244 = vpop.permute.xlu0 %243
        %v245 = vsel %vm236, %v244, %v212
        %246 = vrot.lane.b32.xlu0 %v213, 16
        %v247 = vpop.permute.xlu0 %246
        %v248 = vsel %vm236, %v247, %v213
        %249 = vrot.lane.b32.xlu0 %v214, 16
        %v250 = vpop.permute.xlu0 %249
        %v251 = vsel %vm236, %v250, %v214
        %252 = vrot.lane.b32.xlu0 %v215, 16
        %v253 = vpop.permute.xlu0 %252
        %v254 = vsel %vm236, %v253, %v215
        %255 = vrot.lane.b32.xlu0 %v216, 16
        %v256 = vpop.permute.xlu0 %255
        %v257 = vsel %vm236, %v256, %v216
        %258 = vrot.lane.b32.xlu0 %v217, 16
        %v259 = vpop.permute.xlu0 %258
        %v260 = vsel %vm236, %v259, %v217
        %261 = vrot.lane.b32.xlu0 %v239, 16
        %v262 = vpop.permute.xlu0 %261
        %263 = vrot.lane.b32.xlu0 %v242, 16
        %v264 = vpop.permute.xlu0 %263
        %265 = vrot.lane.b32.xlu0 %v245, 16
        %v266 = vpop.permute.xlu0 %265
        %267 = vrot.lane.b32.xlu0 %v248, 16
        %v268 = vpop.permute.xlu0 %267
        %269 = vrot.lane.b32.xlu0 %v251, 16
        %v270 = vpop.permute.xlu0 %269
        %271 = vrot.lane.b32.xlu0 %v254, 16
        %v272 = vpop.permute.xlu0 %271
        %273 = vrot.lane.b32.xlu0 %v257, 16
        %v274 = vpop.permute.xlu0 %273
        %275 = vrot.lane.b32.xlu0 %v260, 16
        %v276 = vpop.permute.xlu0 %275
        %v277 = vsel %vm236, %v262, %v210
        %v278 = vsel %vm236, %v264, %v211
        %v279 = vsel %vm236, %v266, %v212
        %v280 = vsel %vm236, %v268, %v213
        %v281 = vsel %vm236, %v270, %v214
        %v282 = vsel %vm236, %v272, %v215
        %v283 = vsel %vm236, %v274, %v216
        %v284 = vsel %vm236, %v276, %v217
        %v286 = vlaneseq
        %v287 = vshrl.u32 %v286, 7
        %v288 = vsub.s32 0, %v287
        %v289 = vrot.slane %v235, %v288
        %299 = vrot.lane.b32.xlu0 %v277, 127
        %v300 = vpop.permute.xlu0 %299
        %301 = vrot.lane.b32.xlu0 %v278, 127
        %v302 = vpop.permute.xlu0 %301
        %303 = vrot.lane.b32.xlu0 %v279, 127
        %v304 = vpop.permute.xlu0 %303
        %305 = vrot.lane.b32.xlu0 %v280, 127
        %v306 = vpop.permute.xlu0 %305
        %307 = vrot.lane.b32.xlu0 %v281, 127
        %v308 = vpop.permute.xlu0 %307
        %309 = vrot.lane.b32.xlu0 %v282, 127
        %v310 = vpop.permute.xlu0 %309
        %311 = vrot.lane.b32.xlu0 %v283, 127
        %v312 = vpop.permute.xlu0 %311
        %313 = vrot.lane.b32.xlu0 %v284, 127
        %v314 = vpop.permute.xlu0 %313
        %v323 = vmul.f32 %v289, %v300
        %v324 = vmul.f32 %v289, %v302
        %v325 = vmul.f32 %v289, %v304
        %v326 = vmul.f32 %v289, %v306
        %v327 = vmul.f32 %v289, %v308
        %v328 = vmul.f32 %v289, %v310
        %v329 = vmul.f32 %v289, %v312
        %v330 = vmul.f32 %v289, %v314
        %v331 = vadd.f32 %v226, %v323
        %v332 = vadd.f32 %v227, %v324
        %v333 = vadd.f32 %v228, %v325
        %v334 = vadd.f32 %v229, %v326
        %v335 = vadd.f32 %v230, %v327
        %v336 = vadd.f32 %v231, %v328
        %v337 = vadd.f32 %v232, %v329
        %v338 = vadd.f32 %v233, %v330
        %s339 = scalar_lea.vmem %s0, 1
        %v340 = vld [vmem:[%s339] sm:$0x1]
        %v342 = vlaneseq
        %v343 = vshrl.u32 %v342, 7
        %v344 = vsub.s32 0, %v343
        %v345 = vrot.slane %v340, %v344
        %347 = vrot.lane.b32.xlu0 %v277, 113
        %v348 = vpop.permute.xlu0 %347
        %349 = vrot.lane.b32.xlu0 %v278, 113
        %v350 = vpop.permute.xlu0 %349
        %351 = vrot.lane.b32.xlu0 %v279, 113
        %v352 = vpop.permute.xlu0 %351
        %353 = vrot.lane.b32.xlu0 %v280, 113
        %v354 = vpop.permute.xlu0 %353
        %355 = vrot.lane.b32.xlu0 %v281, 113
        %v356 = vpop.permute.xlu0 %355
        %357 = vrot.lane.b32.xlu0 %v282, 113
        %v358 = vpop.permute.xlu0 %357
        %359 = vrot.lane.b32.xlu0 %v283, 113
        %v360 = vpop.permute.xlu0 %359
        %361 = vrot.lane.b32.xlu0 %v284, 113
        %v362 = vpop.permute.xlu0 %361
        %v371 = vmul.f32 %v345, %v348
        %v372 = vmul.f32 %v345, %v350
        %v373 = vmul.f32 %v345, %v352
        %v374 = vmul.f32 %v345, %v354
        %v375 = vmul.f32 %v345, %v356
        %v376 = vmul.f32 %v345, %v358
        %v377 = vmul.f32 %v345, %v360
        %v378 = vmul.f32 %v345, %v362
        %v379 = vadd.f32 %v331, %v371
        %v380 = vadd.f32 %v332, %v372
        %v381 = vadd.f32 %v333, %v373
        %v382 = vadd.f32 %v334, %v374
        %v383 = vadd.f32 %v335, %v375
        %v384 = vadd.f32 %v336, %v376
        %v385 = vadd.f32 %v337, %v377
        %v386 = vadd.f32 %v338, %v378
        %s387 = scalar_lea.vmem %s0, 4
        %v388 = vld [vmem:[%s387] sm:$0x1]
        %v390 = vlaneseq
        %v391 = vshrl.u32 %v390, 7
        %v392 = vsub.s32 0, %v391
        %v393 = vrot.slane %v388, %v392
        %395 = vrot.lane.b32.xlu0 %v277, 126
        %v396 = vpop.permute.xlu0 %395
        %397 = vrot.lane.b32.xlu0 %v278, 126
        %v398 = vpop.permute.xlu0 %397
        %399 = vrot.lane.b32.xlu0 %v279, 126
        %v400 = vpop.permute.xlu0 %399
        %401 = vrot.lane.b32.xlu0 %v280, 126
        %v402 = vpop.permute.xlu0 %401
        %403 = vrot.lane.b32.xlu0 %v281, 126
        %v404 = vpop.permute.xlu0 %403
        %405 = vrot.lane.b32.xlu0 %v282, 126
        %v406 = vpop.permute.xlu0 %405
        %407 = vrot.lane.b32.xlu0 %v283, 126
        %v408 = vpop.permute.xlu0 %407
        %409 = vrot.lane.b32.xlu0 %v284, 126
        %v410 = vpop.permute.xlu0 %409
        %v419 = vmul.f32 %v393, %v396
        %v420 = vmul.f32 %v393, %v398
        %v421 = vmul.f32 %v393, %v400
        %v422 = vmul.f32 %v393, %v402
        %v423 = vmul.f32 %v393, %v404
        %v424 = vmul.f32 %v393, %v406
        %v425 = vmul.f32 %v393, %v408
        %v426 = vmul.f32 %v393, %v410
        %v427 = vadd.f32 %v379, %v419
        %v428 = vadd.f32 %v380, %v420
        %v429 = vadd.f32 %v381, %v421
        %v430 = vadd.f32 %v382, %v422
        %v431 = vadd.f32 %v383, %v423
        %v432 = vadd.f32 %v384, %v424
        %v433 = vadd.f32 %v385, %v425
        %v434 = vadd.f32 %v386, %v426
        %v435 = vld [vmem:[%s0] sm:$0x1]
        %v437 = vlaneseq
        %v438 = vshrl.u32 %v437, 7
        %v439 = vsub.s32 0, %v438
        %v440 = vrot.slane %v435, %v439
        %442 = vrot.lane.b32.xlu0 %v277, 114
        %v443 = vpop.permute.xlu0 %442
        %444 = vrot.lane.b32.xlu0 %v278, 114
        %v445 = vpop.permute.xlu0 %444
        %446 = vrot.lane.b32.xlu0 %v279, 114
        %v447 = vpop.permute.xlu0 %446
        %448 = vrot.lane.b32.xlu0 %v280, 114
        %v449 = vpop.permute.xlu0 %448
        %450 = vrot.lane.b32.xlu0 %v281, 114
        %v451 = vpop.permute.xlu0 %450
        %452 = vrot.lane.b32.xlu0 %v282, 114
        %v453 = vpop.permute.xlu0 %452
        %454 = vrot.lane.b32.xlu0 %v283, 114
        %v455 = vpop.permute.xlu0 %454
        %456 = vrot.lane.b32.xlu0 %v284, 114
        %v457 = vpop.permute.xlu0 %456
        %v466 = vmul.f32 %v440, %v443
        %v467 = vmul.f32 %v440, %v445
        %v468 = vmul.f32 %v440, %v447
        %v469 = vmul.f32 %v440, %v449
        %v470 = vmul.f32 %v440, %v451
        %v471 = vmul.f32 %v440, %v453
        %v472 = vmul.f32 %v440, %v455
        %v473 = vmul.f32 %v440, %v457
        %v474 = vadd.f32 %v427, %v466
        %v475 = vadd.f32 %v428, %v467
        %v476 = vadd.f32 %v429, %v468
        %v477 = vadd.f32 %v430, %v469
        %v478 = vadd.f32 %v431, %v470
        %v479 = vadd.f32 %v432, %v471
        %v480 = vadd.f32 %v433, %v472
        %v481 = vadd.f32 %v434, %v473
        %s482 = scalar_lea.vmem %s1, 32
        %v483 = vld [vmem:[%s482] sm:$0xff]
        %v484 = vld [vmem:[%s482 + $0x8] sm:$0xff]
        %486 = vset.pattern.permute.xlu0 0
        %487 = vperm.xlu0 %486, %v483
        %v488 = vpop.permute.xlu0 %487
        %491 = vset.pattern.permute.xlu0 0
        %492 = vperm.xlu0 %491, %v484
        %v493 = vpop.permute.xlu0 %492
        %v495 = vmul.f32 %v488, %v474
        %v496 = vmul.f32 %v493, %v475
        %v497 = vmul.f32 %v488, %v476
        %v498 = vmul.f32 %v493, %v477
        %v499 = vmul.f32 %v488, %v478
        %v500 = vmul.f32 %v493, %v479
        %v501 = vmul.f32 %v488, %v480
        %v502 = vmul.f32 %v493, %v481
        %s503 = scalar_lea.vmem %s1, 48
        %v504 = vld [vmem:[%s503] sm:$0xff]
        %v505 = vld [vmem:[%s503 + $0x8] sm:$0xff]
        %v506 = vrot.slane %v474, 1
        %v507 = vrot.slane %v476, 1
        %v508 = vrot.slane %v478, 1
        %v509 = vrot.slane %v480, 1
        %v510 = vrot.slane %v475, 1
        %v511 = vrot.slane %v477, 1
        %v512 = vrot.slane %v479, 1
        %v513 = vrot.slane %v481, 1
        %v514 = vlaneseq
        %v515 = vshrl.u32 %v514, 7
        %vm516 = vcmp.lt.s32.totalorder %v515, 7
        %v517 = vsel %vm516, %v506, %v510
        %v518 = vsel %vm516, %v507, %v511
        %v519 = vsel %vm516, %v508, %v512
        %v520 = vsel %vm516, %v509, %v513
        %v521 = vsel %vm516, %v510, %v506
        %v522 = vsel %vm516, %v511, %v507
        %v523 = vsel %vm516, %v512, %v508
        %v524 = vsel %vm516, %v513, %v509
        %526 = vset.pattern.permute.xlu0 0
        %527 = vperm.xlu0 %526, %v504
        %v528 = vpop.permute.xlu0 %527
        %531 = vset.pattern.permute.xlu0 0
        %532 = vperm.xlu0 %531, %v505
        %v533 = vpop.permute.xlu0 %532
        %v535 = vmul.f32 %v528, %v517
        %v536 = vmul.f32 %v533, %v521
        %v537 = vmul.f32 %v528, %v518
        %v538 = vmul.f32 %v533, %v522
        %v539 = vmul.f32 %v528, %v519
        %v540 = vmul.f32 %v533, %v523
        %v541 = vmul.f32 %v528, %v520
        %v542 = vmul.f32 %v533, %v524
        %v543 = vadd.f32 %v495, %v535
        %v544 = vadd.f32 %v496, %v536
        %v545 = vadd.f32 %v497, %v537
        %v546 = vadd.f32 %v498, %v538
        %v547 = vadd.f32 %v499, %v539
        %v548 = vadd.f32 %v500, %v540
        %v549 = vadd.f32 %v501, %v541
        %v550 = vadd.f32 %v502, %v542
        %s551 = scalar_lea.vmem %s1, 16
        %v552 = vld [vmem:[%s551] sm:$0xff]
        %v553 = vld [vmem:[%s551 + $0x8] sm:$0xff]
        %v554 = vrot.slane %v474, 7
        %v555 = vrot.slane %v476, 7
        %v556 = vrot.slane %v478, 7
        %v557 = vrot.slane %v480, 7
        %v558 = vrot.slane %v475, 7
        %v559 = vrot.slane %v477, 7
        %v560 = vrot.slane %v479, 7
        %v561 = vrot.slane %v481, 7
        %vm562 = vcmp.lt.s32.totalorder %v515, 1
        %v563 = vsel %vm562, %v554, %v558
        %v564 = vsel %vm562, %v555, %v559
        %v565 = vsel %vm562, %v556, %v560
        %v566 = vsel %vm562, %v557, %v561
        %v567 = vsel %vm562, %v558, %v554
        %v568 = vsel %vm562, %v559, %v555
        %v569 = vsel %vm562, %v560, %v556
        %v570 = vsel %vm562, %v561, %v557
        %572 = vset.pattern.permute.xlu0 0
        %573 = vperm.xlu0 %572, %v552
        %v574 = vpop.permute.xlu0 %573
        %577 = vset.pattern.permute.xlu0 0
        %578 = vperm.xlu0 %577, %v553
        %v579 = vpop.permute.xlu0 %578
        %v581 = vmul.f32 %v574, %v567
        %v582 = vmul.f32 %v579, %v563
        %v583 = vmul.f32 %v574, %v568
        %v584 = vmul.f32 %v579, %v564
        %v585 = vmul.f32 %v574, %v569
        %v586 = vmul.f32 %v579, %v565
        %v587 = vmul.f32 %v574, %v570
        %v588 = vmul.f32 %v579, %v566
        %v589 = vadd.f32 %v543, %v581
        %v590 = vadd.f32 %v544, %v582
        %v591 = vadd.f32 %v545, %v583
        %v592 = vadd.f32 %v546, %v584
        %v593 = vadd.f32 %v547, %v585
        %v594 = vadd.f32 %v548, %v586
        %v595 = vadd.f32 %v549, %v587
        %v596 = vadd.f32 %v550, %v588
        %s597 = scalar_lea.vmem %s1, 64
        %v598 = vld [vmem:[%s597] sm:$0xff]
        %v599 = vld [vmem:[%s597 + $0x8] sm:$0xff]
        %v600 = vrot.slane %v474, 2
        %v601 = vrot.slane %v476, 2
        %v602 = vrot.slane %v478, 2
        %v603 = vrot.slane %v480, 2
        %v604 = vrot.slane %v475, 2
        %v605 = vrot.slane %v477, 2
        %v606 = vrot.slane %v479, 2
        %v607 = vrot.slane %v481, 2
        %vm608 = vcmp.lt.s32.totalorder %v515, 6
        %v609 = vsel %vm608, %v600, %v604
        %v610 = vsel %vm608, %v601, %v605
        %v611 = vsel %vm608, %v602, %v606
        %v612 = vsel %vm608, %v603, %v607
        %v613 = vsel %vm608, %v604, %v600
        %v614 = vsel %vm608, %v605, %v601
        %v615 = vsel %vm608, %v606, %v602
        %v616 = vsel %vm608, %v607, %v603
        %618 = vset.pattern.permute.xlu0 0
        %619 = vperm.xlu0 %618, %v598
        %v620 = vpop.permute.xlu0 %619
        %623 = vset.pattern.permute.xlu0 0
        %624 = vperm.xlu0 %623, %v599
        %v625 = vpop.permute.xlu0 %624
        %v627 = vmul.f32 %v620, %v609
        %v628 = vmul.f32 %v625, %v613
        %v629 = vmul.f32 %v620, %v610
        %v630 = vmul.f32 %v625, %v614
        %v631 = vmul.f32 %v620, %v611
        %v632 = vmul.f32 %v625, %v615
        %v633 = vmul.f32 %v620, %v612
        %v634 = vmul.f32 %v625, %v616
        %v635 = vadd.f32 %v589, %v627
        %v636 = vadd.f32 %v590, %v628
        %v637 = vadd.f32 %v591, %v629
        %v638 = vadd.f32 %v592, %v630
        %v639 = vadd.f32 %v593, %v631
        %v640 = vadd.f32 %v594, %v632
        %v641 = vadd.f32 %v595, %v633
        %v642 = vadd.f32 %v596, %v634
        %v643 = vld [vmem:[%s1] sm:$0xff]
        %v644 = vld [vmem:[%s1 + $0x8] sm:$0xff]
        %v645 = vrot.slane %v474, 6
        %v646 = vrot.slane %v476, 6
        %v647 = vrot.slane %v478, 6
        %v648 = vrot.slane %v480, 6
        %v649 = vrot.slane %v475, 6
        %v650 = vrot.slane %v477, 6
        %v651 = vrot.slane %v479, 6
        %v652 = vrot.slane %v481, 6
        %vm653 = vcmp.lt.s32.totalorder %v515, 2
        %v654 = vsel %vm653, %v645, %v649
        %v655 = vsel %vm653, %v646, %v650
        %v656 = vsel %vm653, %v647, %v651
        %v657 = vsel %vm653, %v648, %v652
        %v658 = vsel %vm653, %v649, %v645
        %v659 = vsel %vm653, %v650, %v646
        %v660 = vsel %vm653, %v651, %v647
        %v661 = vsel %vm653, %v652, %v648
        %663 = vset.pattern.permute.xlu0 0
        %664 = vperm.xlu0 %663, %v643
        %v665 = vpop.permute.xlu0 %664
        %668 = vset.pattern.permute.xlu0 0
        %669 = vperm.xlu0 %668, %v644
        %v670 = vpop.permute.xlu0 %669
        %v672 = vmul.f32 %v665, %v658
        %v673 = vmul.f32 %v670, %v654
        %v674 = vmul.f32 %v665, %v659
        %v675 = vmul.f32 %v670, %v655
        %v676 = vmul.f32 %v665, %v660
        %v677 = vmul.f32 %v670, %v656
        %v678 = vmul.f32 %v665, %v661
        %v679 = vmul.f32 %v670, %v657
        %v680 = vadd.f32 %v635, %v672
        %v681 = vadd.f32 %v636, %v673
        %v682 = vadd.f32 %v637, %v674
        %v683 = vadd.f32 %v638, %v675
        %v684 = vadd.f32 %v639, %v676
        %v685 = vadd.f32 %v640, %v677
        %v686 = vadd.f32 %v641, %v678
        %v687 = vadd.f32 %v642, %v679
        %vm688 = vcmask 130048
        %689 = vst.msk [vmem:[%s207] sm:$0xff] %vm688, %v680
        %690 = vst.msk [vmem:[%s207 + $0x8] sm:$0xff] %vm688, %v681
        %691 = vst.msk [vmem:[%s207 + $0x10] sm:$0xff] %vm688, %v682
        %692 = vst.msk [vmem:[%s207 + $0x18] sm:$0xff] %vm688, %v683
        %693 = vst.msk [vmem:[%s207 + $0x20] sm:$0xff] %vm688, %v684
        %694 = vst.msk [vmem:[%s207 + $0x28] sm:$0xff] %vm688, %v685
        %695 = vst.msk [vmem:[%s207 + $0x30] sm:$0xff] %vm688, %v686
        %696 = vst.msk [vmem:[%s207 + $0x38] sm:$0xff] %vm688, %v687
        %s697 = sand.u32 %s112, 1
        %s698 = scalar_lea.sflag [#allocation4], %s697
        %s699 = sand.u32 %s112, 1
        %s700 = smul.addr %s699, 64
        %s701 = scalar_lea.vmem [#allocation5], %s700
        // Predicated region
        $region37: #{tpu_custom_call.1} parent=31 // pred_check
          %p702 = pneg %p122
        $region38: #{tpu_custom_call.1} parent=31 // pred_check_branch
          %704 = sbr.rel (%p702) target = $region40
        $region39: #{tpu_custom_call.1} parent=31 // pred_region
          %s705 = smul.u32 4, %s25
          %s707 = ssub.s32 1024, 1024
          %708 = vsyncadd %s698, %s707
          %s709 = smul.addr %s705, 2
          %s710 = smul.addr %s24, 8
          %s711 = sadd.s32 %s709, %s710
          %s712 = smul.addr %s711, 128
          %s713 = scalar_lea.hbm %s3, %s712
          %s714 = sshll.u32 %s701, 4
          %s715 = int_to_ptr.vmem [resolvable:$true] %s714
          %720 = dma.vmem_to_hbm [thread:$0]  %s715, 1024, %s713, %s698, 128, 128, 8
        $region40: #{tpu_custom_call.1} parent=31 // pred_fallthru
          _
      $region32: #{tpu_custom_call.1} parent=5 // pred_fallthru
        _
      %p721 = scmp.le.s32.totalorder 2, %s15
      // Predicated region
      $region41: #{tpu_custom_call.1} parent=5 // pred_check
        %p722 = pneg %p721
      $region42: #{tpu_custom_call.1} parent=5 // pred_check_branch
        %724 = sbr.rel (%p722) target = $region44
      $region43: #{tpu_custom_call.1} parent=5 // pred_region
        %s725 = ssub.s32 %s15, 2
        // Predicated region
        $region45: #{tpu_custom_call.1} parent=43 // pred_check
          %p726 = pneg %p128
        $region46: #{tpu_custom_call.1} parent=43 // pred_check_branch
          %728 = sbr.rel (%p726) target = $region48
        $region47: #{tpu_custom_call.1} parent=43 // pred_region
          %s729 = sand.u32 %s113, 1
          %s730 = scalar_lea.sflag [#allocation4], %s729
          %s731 = sand.u32 %s113, 1
          %s732 = smul.addr %s731, 64
          %s733 = scalar_lea.vmem [#allocation5], %s732
          %734 = dma.done %s730, 1024
        $region48: #{tpu_custom_call.1} parent=43 // pred_fallthru
          _
      $region44: #{tpu_custom_call.1} parent=5 // pred_fallthru
        _
    $region6: #{tpu_custom_call.1} parent=1 // loop_footer
      %s19 = sadd.s32 1, %s15
    $region7: #{tpu_custom_call.1} parent=1 // loop_footer_branch
      %14 = sbr.rel target = $region3
    $region8: #{tpu_custom_call.1} parent=1 // loop_exit
      _
    %735 = vsyncpa [#allocation3], 1
    %s736 = scalar_lea.sflag [#allocation3], 1
    %737 = vsyncpa %s736, 1
    %738 = vsyncpa [#allocation4], 1
    %s739 = scalar_lea.sflag [#allocation4], 1
    %740 = vsyncpa %s739, 1

</llo_original>
